<compile_context>
chip_gen: v7x
topology: tpu7x:2x2x1
jax: 0.10.0
libtpu: 0.0.40
codegen_flags: <defaults>
</compile_context>

<pallas_src>
import functools

import jax
import jax.numpy as jnp
from jax.experimental import pallas as pl
from jax.experimental.pallas import tpu as pltpu

N_Z = 128
HIDDEN = 128            # device != 'cuda' branch of the reference module
OUT_DIM = 784           # 28 * 28
OUT_PAD = 896           # 7 * 128, lane-aligned padded output width
LEAKY_SLOPE = 0.2
DEFAULT_TILE_M = 256    # batch tile; modest to keep vreg/spill pressure low


def _round_up(x, m):
    return ((x + m - 1) // m) * m


def _leaky_relu(x, slope=LEAKY_SLOPE):
    return jnp.where(x > 0, x, slope * x)


def generator_kernel(x_ref,
                     w1_ref, b1_ref,
                     w2_ref, b2_ref,
                     w3_ref, b3_ref,
                     w4_ref, b4_ref,
                     o_ref):
    """One batch tile of the fused 4-layer MLP.

    Shapes per grid step:
      x:  (TM, 128)  f32
      w1/w2/w3: (128, 128) bf16, b1/b2/b3: (1, 128) f32
      w4: (128, 896) bf16,       b4: (1, 896) f32
      o:  (TM, 896)  f32
    Matmuls run on the MXU in bf16 with f32 accumulation; all elementwise
    math (bias add, LeakyReLU, tanh) stays in f32.
    """
    x = x_ref[...].astype(jnp.bfloat16)

    h = jnp.dot(x, w1_ref[...], preferred_element_type=jnp.float32)
    h = _leaky_relu(h + b1_ref[...])

    h = jnp.dot(h.astype(jnp.bfloat16), w2_ref[...],
                preferred_element_type=jnp.float32)
    h = _leaky_relu(h + b2_ref[...])

    h = jnp.dot(h.astype(jnp.bfloat16), w3_ref[...],
                preferred_element_type=jnp.float32)
    h = _leaky_relu(h + b3_ref[...])

    h = jnp.dot(h.astype(jnp.bfloat16), w4_ref[...],
                preferred_element_type=jnp.float32)
    o_ref[...] = jnp.tanh(h + b4_ref[...])


@functools.partial(jax.jit, static_argnames=("tile_m",))
def generator_forward(z, params, tile_m=DEFAULT_TILE_M):
    """z: (B, n_z) float32 -> (B, 1, 28, 28) float32."""
    B = z.shape[0]
    w1, b1, w2, b2, w3, b3, w4, b4 = params

    # Batch tile: at most `tile_m`, at least a multiple of 8 covering B.
    tm = min(tile_m, max(8, _round_up(B, 8)))
    b_pad = _round_up(B, tm)
    if b_pad != B:
        z = jnp.pad(z, ((0, b_pad - B), (0, 0)))
    grid_m = b_pad // tm

    # Weights feed the MXU as bf16; biases stay f32 for the VPU epilogue.
    w1b = w1.astype(jnp.bfloat16)
    w2b = w2.astype(jnp.bfloat16)
    w3b = w3.astype(jnp.bfloat16)
    # Pad the last layer to a lane-aligned 896-wide output.
    w4b = jnp.pad(w4, ((0, 0), (0, OUT_PAD - OUT_DIM))).astype(jnp.bfloat16)
    b4p = jnp.pad(b4, ((0, 0), (0, OUT_PAD - OUT_DIM)))

    # Resident (non-tiled) operands use constant index maps.
    const2 = lambda i: (0, 0)
    in_specs = [
        pl.BlockSpec((tm, N_Z), lambda i: (i, 0)),          # z tile
        pl.BlockSpec((N_Z, HIDDEN), const2),                # w1
        pl.BlockSpec((1, HIDDEN), const2),                  # b1
        pl.BlockSpec((HIDDEN, HIDDEN), const2),             # w2
        pl.BlockSpec((1, HIDDEN), const2),                  # b2
        pl.BlockSpec((HIDDEN, HIDDEN), const2),             # w3
        pl.BlockSpec((1, HIDDEN), const2),                  # b3
        pl.BlockSpec((HIDDEN, OUT_PAD), const2),            # w4 (padded)
        pl.BlockSpec((1, OUT_PAD), const2),                 # b4 (padded)
    ]
    out_spec = pl.BlockSpec((tm, OUT_PAD), lambda i: (i, 0))

    flops = 2 * b_pad * N_Z * (3 * HIDDEN + OUT_PAD)
    weight_bytes = (N_Z * HIDDEN * 3 + HIDDEN * OUT_PAD) * 2 \
        + (3 * HIDDEN + OUT_PAD) * 4
    bytes_accessed = b_pad * (N_Z + OUT_PAD) * 4 + weight_bytes
    cost = pl.CostEstimate(flops=flops,
                           transcendentals=b_pad * OUT_PAD,
                           bytes_accessed=bytes_accessed)

    out = pl.pallas_call(
        generator_kernel,
        out_shape=jax.ShapeDtypeStruct((b_pad, OUT_PAD), jnp.float32),
        grid=(grid_m,),
        in_specs=in_specs,
        out_specs=out_spec,
        compiler_params=pltpu.CompilerParams(
            dimension_semantics=("parallel",)),
        cost_estimate=cost,
    )(z, w1b, b1, w2b, b2, w3b, b3, w4b, b4p)

    # Drop batch padding and lane padding, then the metadata-only NCHW view.
    out = out[:B, :OUT_DIM]
    return out.reshape(B, 1, 28, 28)


def init_params(key):
    """Deterministic init mimicking PyTorch nn.Linear default
    (uniform in +/- 1/sqrt(fan_in)).  Weights stored as (in, out) so the
    kernel computes x @ W + b."""
    dims = [(N_Z, HIDDEN), (HIDDEN, HIDDEN), (HIDDEN, HIDDEN), (HIDDEN, OUT_DIM)]
    params = []
    for (fan_in, fan_out) in dims:
        key, kw, kb = jax.random.split(key, 3)
        bound = 1.0 / jnp.sqrt(fan_in)
        w = jax.random.uniform(kw, (fan_in, fan_out), jnp.float32, -bound, bound)
        b = jax.random.uniform(kb, (1, fan_out), jnp.float32, -bound, bound)
        params += [w, b]
    return tuple(params)


def reference_forward(z, params):
    """Pure-JAX f32 reference for a sanity check."""
    w1, b1, w2, b2, w3, b3, w4, b4 = params
    h = _leaky_relu(z @ w1 + b1)
    h = _leaky_relu(h @ w2 + b2)
    h = _leaky_relu(h @ w3 + b3)
    h = jnp.tanh(h @ w4 + b4)
    return h.reshape(-1, 1, 28, 28)


if __name__ == "__main__":
    key = jax.random.PRNGKey(0)
    key, kz = jax.random.split(key)

    B = 8
    z = jax.random.normal(kz, (B, N_Z), dtype=jnp.float32)
    params = init_params(key)

    out = generator_forward(z, params)
    out = jax.block_until_ready(out)

    assert out.shape == (B, 1, 28, 28), out.shape
    ref = reference_forward(z, params)
    # bf16 MXU inputs with f32 accumulation -> relaxed tolerance vs f32 ref.
    assert jnp.allclose(out, ref, atol=5e-2, rtol=5e-2), "mismatch vs reference"
    assert jnp.max(jnp.abs(out - ref)) < 5e-2

    print("KERNEL_OK")
</pallas_src>

<mosaic_0001>
module attributes {stable_mosaic.version = 11 : i64} {
  func.func @generator_kernel(%arg0: i32, %arg1: memref<8x128xf32, #tpu.memory_space<vmem>>, %arg2: memref<128x128xbf16, #tpu.memory_space<vmem>>, %arg3: memref<1x128xf32, #tpu.memory_space<vmem>>, %arg4: memref<128x128xbf16, #tpu.memory_space<vmem>>, %arg5: memref<1x128xf32, #tpu.memory_space<vmem>>, %arg6: memref<128x128xbf16, #tpu.memory_space<vmem>>, %arg7: memref<1x128xf32, #tpu.memory_space<vmem>>, %arg8: memref<128x896xbf16, #tpu.memory_space<vmem>>, %arg9: memref<1x896xf32, #tpu.memory_space<vmem>>, %arg10: memref<8x896xf32, #tpu.memory_space<vmem>>) attributes {dimension_semantics = [#tpu.dimension_semantics<parallel>], iteration_bounds = array<i64: 1>, scalar_prefetch = 0 : i64, scratch_operands = 0 : i64, tpu.core_type = #tpu.core_type<tc>, window_params = [{transform_indices = @transform_0, window_bounds = array<i64: 8, 128>}, {pipeline_mode = #tpu.pipeline_mode<synchronous>, transform_indices = @transform_1, window_bounds = array<i64: 128, 128>}, {pipeline_mode = #tpu.pipeline_mode<synchronous>, transform_indices = @transform_2, window_bounds = array<i64: 1, 128>}, {pipeline_mode = #tpu.pipeline_mode<synchronous>, transform_indices = @transform_3, window_bounds = array<i64: 128, 128>}, {pipeline_mode = #tpu.pipeline_mode<synchronous>, transform_indices = @transform_4, window_bounds = array<i64: 1, 128>}, {pipeline_mode = #tpu.pipeline_mode<synchronous>, transform_indices = @transform_5, window_bounds = array<i64: 128, 128>}, {pipeline_mode = #tpu.pipeline_mode<synchronous>, transform_indices = @transform_6, window_bounds = array<i64: 1, 128>}, {pipeline_mode = #tpu.pipeline_mode<synchronous>, transform_indices = @transform_7, window_bounds = array<i64: 128, 896>}, {pipeline_mode = #tpu.pipeline_mode<synchronous>, transform_indices = @transform_8, window_bounds = array<i64: 1, 896>}, {transform_indices = @transform_9, window_bounds = array<i64: 8, 896>}]} {
    %c0 = arith.constant 0 : index
    %c0_0 = arith.constant 0 : index
    %0 = vector.load %arg1[%c0, %c0_0] : memref<8x128xf32, #tpu.memory_space<vmem>>, vector<8x128xf32>
    %1 = arith.truncf %0 : vector<8x128xf32> to vector<8x128xbf16>
    %c0_1 = arith.constant 0 : index
    %c0_2 = arith.constant 0 : index
    %2 = vector.load %arg2[%c0_1, %c0_2] : memref<128x128xbf16, #tpu.memory_space<vmem>>, vector<128x128xbf16>
    %cst = arith.constant dense<0.000000e+00> : vector<8x128xf32>
    %3 = tpu.matmul %1, %2, %cst {dimension_numbers = #tpu.dot_dimension_numbers<[1], [0], [0], [1], [0, 0, 1, 1], [], []>} : vector<8x128xbf16>, vector<128x128xbf16>, vector<8x128xf32> -> vector<8x128xf32>
    %c0_3 = arith.constant 0 : index
    %c0_4 = arith.constant 0 : index
    %4 = vector.load %arg3[%c0_3, %c0_4] : memref<1x128xf32, #tpu.memory_space<vmem>>, vector<1x128xf32>
    %5 = vector.broadcast %4 : vector<1x128xf32> to vector<8x128xf32>
    %6 = arith.addf %3, %5 : vector<8x128xf32>
    %cst_5 = arith.constant 0.000000e+00 : f32
    %7 = vector.broadcast %cst_5 : f32 to vector<8x128xf32>
    %8 = arith.cmpf ogt, %6, %7 : vector<8x128xf32>
    %cst_6 = arith.constant 2.000000e-01 : f32
    %9 = vector.broadcast %cst_6 : f32 to vector<8x128xf32>
    %10 = arith.mulf %9, %6 : vector<8x128xf32>
    %11 = arith.select %8, %6, %10 : vector<8x128xi1>, vector<8x128xf32>
    %12 = arith.truncf %11 : vector<8x128xf32> to vector<8x128xbf16>
    %c0_7 = arith.constant 0 : index
    %c0_8 = arith.constant 0 : index
    %13 = vector.load %arg4[%c0_7, %c0_8] : memref<128x128xbf16, #tpu.memory_space<vmem>>, vector<128x128xbf16>
    %cst_9 = arith.constant dense<0.000000e+00> : vector<8x128xf32>
    %14 = tpu.matmul %12, %13, %cst_9 {dimension_numbers = #tpu.dot_dimension_numbers<[1], [0], [0], [1], [0, 0, 1, 1], [], []>} : vector<8x128xbf16>, vector<128x128xbf16>, vector<8x128xf32> -> vector<8x128xf32>
    %c0_10 = arith.constant 0 : index
    %c0_11 = arith.constant 0 : index
    %15 = vector.load %arg5[%c0_10, %c0_11] : memref<1x128xf32, #tpu.memory_space<vmem>>, vector<1x128xf32>
    %16 = vector.broadcast %15 : vector<1x128xf32> to vector<8x128xf32>
    %17 = arith.addf %14, %16 : vector<8x128xf32>
    %cst_12 = arith.constant 0.000000e+00 : f32
    %18 = vector.broadcast %cst_12 : f32 to vector<8x128xf32>
    %19 = arith.cmpf ogt, %17, %18 : vector<8x128xf32>
    %cst_13 = arith.constant 2.000000e-01 : f32
    %20 = vector.broadcast %cst_13 : f32 to vector<8x128xf32>
    %21 = arith.mulf %20, %17 : vector<8x128xf32>
    %22 = arith.select %19, %17, %21 : vector<8x128xi1>, vector<8x128xf32>
    %23 = arith.truncf %22 : vector<8x128xf32> to vector<8x128xbf16>
    %c0_14 = arith.constant 0 : index
    %c0_15 = arith.constant 0 : index
    %24 = vector.load %arg6[%c0_14, %c0_15] : memref<128x128xbf16, #tpu.memory_space<vmem>>, vector<128x128xbf16>
    %cst_16 = arith.constant dense<0.000000e+00> : vector<8x128xf32>
    %25 = tpu.matmul %23, %24, %cst_16 {dimension_numbers = #tpu.dot_dimension_numbers<[1], [0], [0], [1], [0, 0, 1, 1], [], []>} : vector<8x128xbf16>, vector<128x128xbf16>, vector<8x128xf32> -> vector<8x128xf32>
    %c0_17 = arith.constant 0 : index
    %c0_18 = arith.constant 0 : index
    %26 = vector.load %arg7[%c0_17, %c0_18] : memref<1x128xf32, #tpu.memory_space<vmem>>, vector<1x128xf32>
    %27 = vector.broadcast %26 : vector<1x128xf32> to vector<8x128xf32>
    %28 = arith.addf %25, %27 : vector<8x128xf32>
    %cst_19 = arith.constant 0.000000e+00 : f32
    %29 = vector.broadcast %cst_19 : f32 to vector<8x128xf32>
    %30 = arith.cmpf ogt, %28, %29 : vector<8x128xf32>
    %cst_20 = arith.constant 2.000000e-01 : f32
    %31 = vector.broadcast %cst_20 : f32 to vector<8x128xf32>
    %32 = arith.mulf %31, %28 : vector<8x128xf32>
    %33 = arith.select %30, %28, %32 : vector<8x128xi1>, vector<8x128xf32>
    %34 = arith.truncf %33 : vector<8x128xf32> to vector<8x128xbf16>
    %c0_21 = arith.constant 0 : index
    %c0_22 = arith.constant 0 : index
    %35 = vector.load %arg8[%c0_21, %c0_22] : memref<128x896xbf16, #tpu.memory_space<vmem>>, vector<128x896xbf16>
    %cst_23 = arith.constant dense<0.000000e+00> : vector<8x896xf32>
    %36 = tpu.matmul %34, %35, %cst_23 {dimension_numbers = #tpu.dot_dimension_numbers<[1], [0], [0], [1], [0, 0, 1, 1], [], []>} : vector<8x128xbf16>, vector<128x896xbf16>, vector<8x896xf32> -> vector<8x896xf32>
    %c0_24 = arith.constant 0 : index
    %c0_25 = arith.constant 0 : index
    %37 = vector.load %arg9[%c0_24, %c0_25] : memref<1x896xf32, #tpu.memory_space<vmem>>, vector<1x896xf32>
    %38 = vector.broadcast %37 : vector<1x896xf32> to vector<8x896xf32>
    %39 = arith.addf %36, %38 : vector<8x896xf32>
    %40 = math.tanh %39 : vector<8x896xf32>
    %c0_26 = arith.constant 0 : index
    %c0_27 = arith.constant 0 : index
    %41 = vector.load %arg10[%c0_26, %c0_27] : memref<8x896xf32, #tpu.memory_space<vmem>>, vector<8x896xf32>
    tpu.vector_store %arg10[%c0_26, %c0_27], %40 {strides = array<i32>} : memref<8x896xf32, #tpu.memory_space<vmem>>, vector<8x896xf32>,
    return
  }
  func.func @transform_0(%arg0: i32) -> (i32, i32) {
    %c0_i32 = arith.constant 0 : i32
    %c0_i32_0 = arith.constant 0 : i32
    return %arg0, %c0_i32 : i32, i32
  }
  func.func @transform_1(%arg0: i32) -> (i32, i32) {
    %c0_i32 = arith.constant 0 : i32
    %c0_i32_0 = arith.constant 0 : i32
    %c0_i32_1 = arith.constant 0 : i32
    return %c0_i32, %c0_i32_0 : i32, i32
  }
  func.func @transform_2(%arg0: i32) -> (i32, i32) {
    %c0_i32 = arith.constant 0 : i32
    %c0_i32_0 = arith.constant 0 : i32
    %c0_i32_1 = arith.constant 0 : i32
    return %c0_i32, %c0_i32_0 : i32, i32
  }
  func.func @transform_3(%arg0: i32) -> (i32, i32) {
    %c0_i32 = arith.constant 0 : i32
    %c0_i32_0 = arith.constant 0 : i32
    %c0_i32_1 = arith.constant 0 : i32
    return %c0_i32, %c0_i32_0 : i32, i32
  }
  func.func @transform_4(%arg0: i32) -> (i32, i32) {
    %c0_i32 = arith.constant 0 : i32
    %c0_i32_0 = arith.constant 0 : i32
    %c0_i32_1 = arith.constant 0 : i32
    return %c0_i32, %c0_i32_0 : i32, i32
  }
  func.func @transform_5(%arg0: i32) -> (i32, i32) {
    %c0_i32 = arith.constant 0 : i32
    %c0_i32_0 = arith.constant 0 : i32
    %c0_i32_1 = arith.constant 0 : i32
    return %c0_i32, %c0_i32_0 : i32, i32
  }
  func.func @transform_6(%arg0: i32) -> (i32, i32) {
    %c0_i32 = arith.constant 0 : i32
    %c0_i32_0 = arith.constant 0 : i32
    %c0_i32_1 = arith.constant 0 : i32
    return %c0_i32, %c0_i32_0 : i32, i32
  }
  func.func @transform_7(%arg0: i32) -> (i32, i32) {
    %c0_i32 = arith.constant 0 : i32
    %c0_i32_0 = arith.constant 0 : i32
    %c0_i32_1 = arith.constant 0 : i32
    return %c0_i32, %c0_i32_0 : i32, i32
  }
  func.func @transform_8(%arg0: i32) -> (i32, i32) {
    %c0_i32 = arith.constant 0 : i32
    %c0_i32_0 = arith.constant 0 : i32
    %c0_i32_1 = arith.constant 0 : i32
    return %c0_i32, %c0_i32_0 : i32, i32
  }
  func.func @transform_9(%arg0: i32) -> (i32, i32) {
    %c0_i32 = arith.constant 0 : i32
    %c0_i32_0 = arith.constant 0 : i32
    return %arg0, %c0_i32 : i32, i32
  }
}

</mosaic_0001>

<llo_original>
// kernel: generator_forward.1
$region0: #{generator_forward.1}
  #allocation0 [shape = 'u32[]', space=smem, size = 0x4, offset = 0x4, fixed_abs, tag = 'smem constant byte address 0x4 - core index']
  #allocation1 [shape = 'u32[144,128]{1,0:T(1,128)}', space=vmem, size = 0x12000, scoped, tag = 'internal scratch']
  %s0 = inlined_call_operand.vmem [shape: f32[8,128], index: 0, kind: input, shape index: {}]
  %s1 = inlined_call_operand.vmem [shape: bf16[128,128], index: 1, kind: input, shape index: {}]
  %s2 = inlined_call_operand.vmem [shape: f32[1,128], index: 2, kind: input, shape index: {}]
  %s3 = inlined_call_operand.vmem [shape: bf16[128,128], index: 3, kind: input, shape index: {}]
  %s4 = inlined_call_operand.vmem [shape: f32[1,128], index: 4, kind: input, shape index: {}]
  %s5 = inlined_call_operand.vmem [shape: bf16[128,128], index: 5, kind: input, shape index: {}]
  %s6 = inlined_call_operand.vmem [shape: f32[1,128], index: 6, kind: input, shape index: {}]
  %s7 = inlined_call_operand.vmem [shape: bf16[128,896], index: 7, kind: input, shape index: {}]
  %s8 = inlined_call_operand.vmem [shape: f32[1,896], index: 8, kind: input, shape index: {}]
  %s9 = inlined_call_operand.vmem [shape: f32[8,896], index: 9, kind: output, shape index: {}]
  %s10 = sld [smem:[#allocation0]]
  $region46: #{generator_forward.1} parent=0
    _
  %s12 = ssub.s32 1, %s10
  %s13 = scalar_select 0, %s12, %s10
  // Predicated region
  $region2: #{generator_forward.1} parent=0 // pred_check
    _
  $region3: #{generator_forward.1} parent=0 // pred_check_branch
    %15 = sbr.rel (0) target = $region5
  $region4: #{generator_forward.1} parent=0 // pred_region
    _
  $region5: #{generator_forward.1} parent=0 // pred_fallthru
    _
  // Predicated region
  $region6: #{generator_forward.1} parent=0 // pred_check
    _
  $region7: #{generator_forward.1} parent=0 // pred_check_branch
    %17 = sbr.rel (0) target = $region9
  $region8: #{generator_forward.1} parent=0 // pred_region
    _
  $region9: #{generator_forward.1} parent=0 // pred_fallthru
    _
  // Predicated region
  $region10: #{generator_forward.1} parent=0 // pred_check
    _
  $region11: #{generator_forward.1} parent=0 // pred_check_branch
    %19 = sbr.rel (0) target = $region13
  $region12: #{generator_forward.1} parent=0 // pred_region
    _
  $region13: #{generator_forward.1} parent=0 // pred_fallthru
    _
  // Predicated region
  $region14: #{generator_forward.1} parent=0 // pred_check
    _
  $region15: #{generator_forward.1} parent=0 // pred_check_branch
    %21 = sbr.rel (0) target = $region17
  $region16: #{generator_forward.1} parent=0 // pred_region
    _
  $region17: #{generator_forward.1} parent=0 // pred_fallthru
    _
  // Predicated region
  $region18: #{generator_forward.1} parent=0 // pred_check
    _
  $region19: #{generator_forward.1} parent=0 // pred_check_branch
    %23 = sbr.rel (0) target = $region21
  $region20: #{generator_forward.1} parent=0 // pred_region
    _
  $region21: #{generator_forward.1} parent=0 // pred_fallthru
    _
  // Predicated region
  $region22: #{generator_forward.1} parent=0 // pred_check
    _
  $region23: #{generator_forward.1} parent=0 // pred_check_branch
    %25 = sbr.rel (0) target = $region25
  $region24: #{generator_forward.1} parent=0 // pred_region
    _
  $region25: #{generator_forward.1} parent=0 // pred_fallthru
    _
  // Predicated region
  $region26: #{generator_forward.1} parent=0 // pred_check
    _
  $region27: #{generator_forward.1} parent=0 // pred_check_branch
    %27 = sbr.rel (0) target = $region29
  $region28: #{generator_forward.1} parent=0 // pred_region
    _
  $region29: #{generator_forward.1} parent=0 // pred_fallthru
    _
  // Predicated region
  $region30: #{generator_forward.1} parent=0 // pred_check
    _
  $region31: #{generator_forward.1} parent=0 // pred_check_branch
    %29 = sbr.rel (0) target = $region33
  $region32: #{generator_forward.1} parent=0 // pred_region
    _
  $region33: #{generator_forward.1} parent=0 // pred_fallthru
    _
  // Predicated region
  $region34: #{generator_forward.1} parent=0 // pred_check
    _
  $region35: #{generator_forward.1} parent=0 // pred_check_branch
    %31 = sbr.rel (0) target = $region37
  $region36: #{generator_forward.1} parent=0 // pred_region
    _
  $region37: #{generator_forward.1} parent=0 // pred_fallthru
    _
  %v33 = vld [vmem:[%s0] sm:$0xff]
  %v34 = vpack.c.bf16 %v33, %v33
  %v35 = vld [vmem:[%s1] sm:$0xf]
  %v36 = vld [vmem:[%s1 + $0x4] sm:$0xf]
  %v37 = vld [vmem:[%s1 + $0x8] sm:$0xf]
  %v38 = vld [vmem:[%s1 + $0xc] sm:$0xf]
  %v39 = vld [vmem:[%s1 + $0x10] sm:$0xf]
  %v40 = vld [vmem:[%s1 + $0x14] sm:$0xf]
  %v41 = vld [vmem:[%s1 + $0x18] sm:$0xf]
  %v42 = vld [vmem:[%s1 + $0x1c] sm:$0xf]
  %v43 = vld [vmem:[%s1 + $0x20] sm:$0xf]
  %v44 = vld [vmem:[%s1 + $0x24] sm:$0xf]
  %v45 = vld [vmem:[%s1 + $0x28] sm:$0xf]
  %v46 = vld [vmem:[%s1 + $0x2c] sm:$0xf]
  %v47 = vld [vmem:[%s1 + $0x30] sm:$0xf]
  %v48 = vld [vmem:[%s1 + $0x34] sm:$0xf]
  %v49 = vld [vmem:[%s1 + $0x38] sm:$0xf]
  %v50 = vld [vmem:[%s1 + $0x3c] sm:$0xf]
  %v51 = vld [vmem:[%s2] sm:$0x1]
  %v53 = vlaneseq
  %v54 = vshrl.u32 %v53, 7
  %v55 = vsub.s32 0, %v54
  %v56 = vrot.slane %v51, %v55
  %v74 = vunpack.c.l.b16 %v35
  %v75 = vunpack.c.l.b16 %v36
  %v76 = vunpack.c.l.b16 %v37
  %v77 = vunpack.c.l.b16 %v38
  %v78 = vunpack.c.l.b16 %v39
  %v79 = vunpack.c.l.b16 %v40
  %v80 = vunpack.c.l.b16 %v41
  %v81 = vunpack.c.l.b16 %v42
  %v82 = vunpack.c.l.b16 %v43
  %v83 = vunpack.c.l.b16 %v44
  %v84 = vunpack.c.l.b16 %v45
  %v85 = vunpack.c.l.b16 %v46
  %v86 = vunpack.c.l.b16 %v47
  %v87 = vunpack.c.l.b16 %v48
  %v88 = vunpack.c.l.b16 %v49
  %v89 = vunpack.c.l.b16 %v50
  %v90 = vpack.c.b16 %v75, %v74
  %v91 = vpack.c.b16 %v77, %v76
  %v92 = vpack.c.b16 %v79, %v78
  %v93 = vpack.c.b16 %v81, %v80
  %v94 = vpack.c.b16 %v83, %v82
  %v95 = vpack.c.b16 %v85, %v84
  %v96 = vpack.c.b16 %v87, %v86
  %v97 = vpack.c.b16 %v89, %v88
  %106 = vmatprep.subr.bf16.mxu0 0
  %107 = vmatpush1.bf16.msra.mxu0 %v90
  %108 = vmatprep.subr.bf16.mxu0 0
  %109 = vmatpush1.bf16.msra.mxu0 %v91
  %110 = vmatprep.subr.bf16.mxu0 0
  %111 = vmatpush1.bf16.msra.mxu0 %v92
  %112 = vmatprep.subr.bf16.mxu0 0
  %113 = vmatpush1.bf16.msra.mxu0 %v93
  %114 = vmatprep.subr.bf16.mxu0 0
  %115 = vmatpush1.bf16.msra.mxu0 %v94
  %116 = vmatprep.subr.bf16.mxu0 0
  %117 = vmatpush1.bf16.msra.mxu0 %v95
  %118 = vmatprep.subr.bf16.mxu0 0
  %119 = vmatpush1.bf16.msra.mxu0 %v96
  %120 = vmatprep.subr.bf16.mxu0 0
  %121 = vmatpush1.bf16.msra.mxu0 %v97
  %122 = vmatprep.subr.bf16.mxu0 0
  %123 = vmatpush1.bf16.msra.mxu0 0
  %124 = vmatprep.subr.bf16.mxu0 0
  %125 = vmatpush1.bf16.msra.mxu0 0
  %126 = vmatprep.subr.bf16.mxu0 0
  %127 = vmatpush1.bf16.msra.mxu0 0
  %128 = vmatprep.subr.bf16.mxu0 0
  %129 = vmatpush1.bf16.msra.mxu0 0
  %130 = vmatprep.subr.bf16.mxu0 0
  %131 = vmatpush1.bf16.msra.mxu0 0
  %132 = vmatprep.subr.bf16.mxu0 0
  %133 = vmatpush1.bf16.msra.mxu0 0
  %134 = vmatprep.subr.bf16.mxu0 0
  %135 = vmatpush1.bf16.msra.mxu0 0
  %136 = vmatprep.subr.bf16.mxu0 0
  %137 = vmatpush1.bf16.msra.mxu0 0
  %138 = vmatprep.mubr.bf16.mxu0 0
  %139 = vmatmul.mubr.bf16.gmra.mrb[0].mxu0 %v34
  %v140 = vpop.f32.mrb[0].mxu0
  %v141 = vadd.f32 %v56, %v140
  %v142 = vpop.f32.mrb[0].mxu0
  %v143 = vpop.f32.mrb[0].mxu0
  %v144 = vpop.f32.mrb[0].mxu0
  %145 = vdwg.mxu0
  %vm146 = vcmp.gt.f32.partialorder %v141, 0.0
  %v147 = vmul.f32 %v141, 0.2
  %v148 = vsel %vm146, %v141, %v147
  %v149 = vpack.c.bf16 %v148, %v148
  %v150 = vld [vmem:[%s3] sm:$0xf]
  %v151 = vld [vmem:[%s3 + $0x4] sm:$0xf]
  %v152 = vld [vmem:[%s3 + $0x8] sm:$0xf]
  %v153 = vld [vmem:[%s3 + $0xc] sm:$0xf]
  %v154 = vld [vmem:[%s3 + $0x10] sm:$0xf]
  %v155 = vld [vmem:[%s3 + $0x14] sm:$0xf]
  %v156 = vld [vmem:[%s3 + $0x18] sm:$0xf]
  %v157 = vld [vmem:[%s3 + $0x1c] sm:$0xf]
  %v158 = vld [vmem:[%s3 + $0x20] sm:$0xf]
  %v159 = vld [vmem:[%s3 + $0x24] sm:$0xf]
  %v160 = vld [vmem:[%s3 + $0x28] sm:$0xf]
  %v161 = vld [vmem:[%s3 + $0x2c] sm:$0xf]
  %v162 = vld [vmem:[%s3 + $0x30] sm:$0xf]
  %v163 = vld [vmem:[%s3 + $0x34] sm:$0xf]
  %v164 = vld [vmem:[%s3 + $0x38] sm:$0xf]
  %v165 = vld [vmem:[%s3 + $0x3c] sm:$0xf]
  %v166 = vld [vmem:[%s4] sm:$0x1]
  %v168 = vlaneseq
  %v169 = vshrl.u32 %v168, 7
  %v170 = vsub.s32 0, %v169
  %v171 = vrot.slane %v166, %v170
  %v189 = vunpack.c.l.b16 %v150
  %v190 = vunpack.c.l.b16 %v151
  %v191 = vunpack.c.l.b16 %v152
  %v192 = vunpack.c.l.b16 %v153
  %v193 = vunpack.c.l.b16 %v154
  %v194 = vunpack.c.l.b16 %v155
  %v195 = vunpack.c.l.b16 %v156
  %v196 = vunpack.c.l.b16 %v157
  %v197 = vunpack.c.l.b16 %v158
  %v198 = vunpack.c.l.b16 %v159
  %v199 = vunpack.c.l.b16 %v160
  %v200 = vunpack.c.l.b16 %v161
  %v201 = vunpack.c.l.b16 %v162
  %v202 = vunpack.c.l.b16 %v163
  %v203 = vunpack.c.l.b16 %v164
  %v204 = vunpack.c.l.b16 %v165
  %v205 = vpack.c.b16 %v190, %v189
  %v206 = vpack.c.b16 %v192, %v191
  %v207 = vpack.c.b16 %v194, %v193
  %v208 = vpack.c.b16 %v196, %v195
  %v209 = vpack.c.b16 %v198, %v197
  %v210 = vpack.c.b16 %v200, %v199
  %v211 = vpack.c.b16 %v202, %v201
  %v212 = vpack.c.b16 %v204, %v203
  %221 = vmatprep.subr.bf16.mxu0 0
  %222 = vmatpush1.bf16.msra.mxu0 %v205
  %223 = vmatprep.subr.bf16.mxu0 0
  %224 = vmatpush1.bf16.msra.mxu0 %v206
  %225 = vmatprep.subr.bf16.mxu0 0
  %226 = vmatpush1.bf16.msra.mxu0 %v207
  %227 = vmatprep.subr.bf16.mxu0 0
  %228 = vmatpush1.bf16.msra.mxu0 %v208
  %229 = vmatprep.subr.bf16.mxu0 0
  %230 = vmatpush1.bf16.msra.mxu0 %v209
  %231 = vmatprep.subr.bf16.mxu0 0
  %232 = vmatpush1.bf16.msra.mxu0 %v210
  %233 = vmatprep.subr.bf16.mxu0 0
  %234 = vmatpush1.bf16.msra.mxu0 %v211
  %235 = vmatprep.subr.bf16.mxu0 0
  %236 = vmatpush1.bf16.msra.mxu0 %v212
  %237 = vmatprep.subr.bf16.mxu0 0
  %238 = vmatpush1.bf16.msra.mxu0 0
  %239 = vmatprep.subr.bf16.mxu0 0
  %240 = vmatpush1.bf16.msra.mxu0 0
  %241 = vmatprep.subr.bf16.mxu0 0
  %242 = vmatpush1.bf16.msra.mxu0 0
  %243 = vmatprep.subr.bf16.mxu0 0
  %244 = vmatpush1.bf16.msra.mxu0 0
  %245 = vmatprep.subr.bf16.mxu0 0
  %246 = vmatpush1.bf16.msra.mxu0 0
  %247 = vmatprep.subr.bf16.mxu0 0
  %248 = vmatpush1.bf16.msra.mxu0 0
  %249 = vmatprep.subr.bf16.mxu0 0
  %250 = vmatpush1.bf16.msra.mxu0 0
  %251 = vmatprep.subr.bf16.mxu0 0
  %252 = vmatpush1.bf16.msra.mxu0 0
  %253 = vmatprep.mubr.bf16.mxu0 0
  %254 = vmatmul.mubr.bf16.gmra.mrb[0].mxu0 %v149
  %v255 = vpop.f32.mrb[0].mxu0
  %v256 = vadd.f32 %v171, %v255
  %v257 = vpop.f32.mrb[0].mxu0
  %v258 = vpop.f32.mrb[0].mxu0
  %v259 = vpop.f32.mrb[0].mxu0
  %260 = vdwg.mxu0
  %vm261 = vcmp.gt.f32.partialorder %v256, 0.0
  %v262 = vmul.f32 %v256, 0.2
  %v263 = vsel %vm261, %v256, %v262
  %v264 = vpack.c.bf16 %v263, %v263
  %v265 = vld [vmem:[%s5] sm:$0xf]
  %v266 = vld [vmem:[%s5 + $0x4] sm:$0xf]
  %v267 = vld [vmem:[%s5 + $0x8] sm:$0xf]
  %v268 = vld [vmem:[%s5 + $0xc] sm:$0xf]
  %v269 = vld [vmem:[%s5 + $0x10] sm:$0xf]
  %v270 = vld [vmem:[%s5 + $0x14] sm:$0xf]
  %v271 = vld [vmem:[%s5 + $0x18] sm:$0xf]
  %v272 = vld [vmem:[%s5 + $0x1c] sm:$0xf]
  %v273 = vld [vmem:[%s5 + $0x20] sm:$0xf]
  %v274 = vld [vmem:[%s5 + $0x24] sm:$0xf]
  %v275 = vld [vmem:[%s5 + $0x28] sm:$0xf]
  %v276 = vld [vmem:[%s5 + $0x2c] sm:$0xf]
  %v277 = vld [vmem:[%s5 + $0x30] sm:$0xf]
  %v278 = vld [vmem:[%s5 + $0x34] sm:$0xf]
  %v279 = vld [vmem:[%s5 + $0x38] sm:$0xf]
  %v280 = vld [vmem:[%s5 + $0x3c] sm:$0xf]
  %v281 = vld [vmem:[%s6] sm:$0x1]
  %v283 = vlaneseq
  %v284 = vshrl.u32 %v283, 7
  %v285 = vsub.s32 0, %v284
  %v286 = vrot.slane %v281, %v285
  %v304 = vunpack.c.l.b16 %v265
  %v305 = vunpack.c.l.b16 %v266
  %v306 = vunpack.c.l.b16 %v267
  %v307 = vunpack.c.l.b16 %v268
  %v308 = vunpack.c.l.b16 %v269
  %v309 = vunpack.c.l.b16 %v270
  %v310 = vunpack.c.l.b16 %v271
  %v311 = vunpack.c.l.b16 %v272
  %v312 = vunpack.c.l.b16 %v273
  %v313 = vunpack.c.l.b16 %v274
  %v314 = vunpack.c.l.b16 %v275
  %v315 = vunpack.c.l.b16 %v276
  %v316 = vunpack.c.l.b16 %v277
  %v317 = vunpack.c.l.b16 %v278
  %v318 = vunpack.c.l.b16 %v279
  %v319 = vunpack.c.l.b16 %v280
  %v320 = vpack.c.b16 %v305, %v304
  %v321 = vpack.c.b16 %v307, %v306
  %v322 = vpack.c.b16 %v309, %v308
  %v323 = vpack.c.b16 %v311, %v310
  %v324 = vpack.c.b16 %v313, %v312
  %v325 = vpack.c.b16 %v315, %v314
  %v326 = vpack.c.b16 %v317, %v316
  %v327 = vpack.c.b16 %v319, %v318
  %336 = vmatprep.subr.bf16.mxu0 0
  %337 = vmatpush1.bf16.msra.mxu0 %v320
  %338 = vmatprep.subr.bf16.mxu0 0
  %339 = vmatpush1.bf16.msra.mxu0 %v321
  %340 = vmatprep.subr.bf16.mxu0 0
  %341 = vmatpush1.bf16.msra.mxu0 %v322
  %342 = vmatprep.subr.bf16.mxu0 0
  %343 = vmatpush1.bf16.msra.mxu0 %v323
  %344 = vmatprep.subr.bf16.mxu0 0
  %345 = vmatpush1.bf16.msra.mxu0 %v324
  %346 = vmatprep.subr.bf16.mxu0 0
  %347 = vmatpush1.bf16.msra.mxu0 %v325
  %348 = vmatprep.subr.bf16.mxu0 0
  %349 = vmatpush1.bf16.msra.mxu0 %v326
  %350 = vmatprep.subr.bf16.mxu0 0
  %351 = vmatpush1.bf16.msra.mxu0 %v327
  %352 = vmatprep.subr.bf16.mxu0 0
  %353 = vmatpush1.bf16.msra.mxu0 0
  %354 = vmatprep.subr.bf16.mxu0 0
  %355 = vmatpush1.bf16.msra.mxu0 0
  %356 = vmatprep.subr.bf16.mxu0 0
  %357 = vmatpush1.bf16.msra.mxu0 0
  %358 = vmatprep.subr.bf16.mxu0 0
  %359 = vmatpush1.bf16.msra.mxu0 0
  %360 = vmatprep.subr.bf16.mxu0 0
  %361 = vmatpush1.bf16.msra.mxu0 0
  %362 = vmatprep.subr.bf16.mxu0 0
  %363 = vmatpush1.bf16.msra.mxu0 0
  %364 = vmatprep.subr.bf16.mxu0 0
  %365 = vmatpush1.bf16.msra.mxu0 0
  %366 = vmatprep.subr.bf16.mxu0 0
  %367 = vmatpush1.bf16.msra.mxu0 0
  %368 = vmatprep.mubr.bf16.mxu0 0
  %369 = vmatmul.mubr.bf16.gmra.mrb[0].mxu0 %v264
  %v370 = vpop.f32.mrb[0].mxu0
  %v371 = vadd.f32 %v286, %v370
  %v372 = vpop.f32.mrb[0].mxu0
  %v373 = vpop.f32.mrb[0].mxu0
  %v374 = vpop.f32.mrb[0].mxu0
  %375 = vdwg.mxu0
  %vm376 = vcmp.gt.f32.partialorder %v371, 0.0
  %v377 = vmul.f32 %v371, 0.2
  %v378 = vsel %vm376, %v371, %v377
  %v379 = vpack.c.bf16 %v378, %v378
  %v380 = vld [vmem:[%s7] sm:$0xff]
  %v381 = vld [vmem:[%s7 + $0x8] sm:$0xff]
  %v382 = vld [vmem:[%s7 + $0x10] sm:$0xff]
  %v383 = vld [vmem:[%s7 + $0x18] sm:$0xf]
  %v384 = vld [vmem:[%s7 + $0x1c] sm:$0xff]
  %v385 = vld [vmem:[%s7 + $0x24] sm:$0xff]
  %v386 = vld [vmem:[%s7 + $0x2c] sm:$0xff]
  %v387 = vld [vmem:[%s7 + $0x34] sm:$0xf]
  %v388 = vld [vmem:[%s7 + $0x38] sm:$0xff]
  %v389 = vld [vmem:[%s7 + $0x40] sm:$0xff]
  %v390 = vld [vmem:[%s7 + $0x48] sm:$0xff]
  %v391 = vld [vmem:[%s7 + $0x50] sm:$0xf]
  %v392 = vld [vmem:[%s7 + $0x54] sm:$0xff]
  %v393 = vld [vmem:[%s7 + $0x5c] sm:$0xff]
  %v394 = vld [vmem:[%s7 + $0x64] sm:$0xff]
  %v395 = vld [vmem:[%s7 + $0x6c] sm:$0xf]
  %v396 = vld [vmem:[%s7 + $0x70] sm:$0xff]
  %v397 = vld [vmem:[%s7 + $0x78] sm:$0xff]
  %v398 = vld [vmem:[%s7 + $0x80] sm:$0xff]
  %v399 = vld [vmem:[%s7 + $0x88] sm:$0xf]
  %v400 = vld [vmem:[%s7 + $0x8c] sm:$0xff]
  %v401 = vld [vmem:[%s7 + $0x94] sm:$0xff]
  %v402 = vld [vmem:[%s7 + $0x9c] sm:$0xff]
  %v403 = vld [vmem:[%s7 + $0xa4] sm:$0xf]
  %v404 = vld [vmem:[%s7 + $0xa8] sm:$0xff]
  %v405 = vld [vmem:[%s7 + $0xb0] sm:$0xff]
  %v406 = vld [vmem:[%s7 + $0xb8] sm:$0xff]
  %v407 = vld [vmem:[%s7 + $0xc0] sm:$0xf]
  %v408 = vld [vmem:[%s7 + $0xc4] sm:$0xff]
  %v409 = vld [vmem:[%s7 + $0xcc] sm:$0xff]
  %v410 = vld [vmem:[%s7 + $0xd4] sm:$0xff]
  %v411 = vld [vmem:[%s7 + $0xdc] sm:$0xf]
  %v412 = vld [vmem:[%s7 + $0xe0] sm:$0xff]
  %v413 = vld [vmem:[%s7 + $0xe8] sm:$0xff]
  %v414 = vld [vmem:[%s7 + $0xf0] sm:$0xff]
  %v415 = vld [vmem:[%s7 + $0xf8] sm:$0xf]
  %v416 = vld [vmem:[%s7 + $0xfc] sm:$0xff]
  %v417 = vld [vmem:[%s7 + $0x104] sm:$0xff]
  %v418 = vld [vmem:[%s7 + $0x10c] sm:$0xff]
  %v419 = vld [vmem:[%s7 + $0x114] sm:$0xf]
  %v420 = vld [vmem:[%s7 + $0x118] sm:$0xff]
  %v421 = vld [vmem:[%s7 + $0x120] sm:$0xff]
  %v422 = vld [vmem:[%s7 + $0x128] sm:$0xff]
  %v423 = vld [vmem:[%s7 + $0x130] sm:$0xf]
  %v424 = vld [vmem:[%s7 + $0x134] sm:$0xff]
  %v425 = vld [vmem:[%s7 + $0x13c] sm:$0xff]
  %v426 = vld [vmem:[%s7 + $0x144] sm:$0xff]
  %v427 = vld [vmem:[%s7 + $0x14c] sm:$0xf]
  %v428 = vld [vmem:[%s7 + $0x150] sm:$0xff]
  %v429 = vld [vmem:[%s7 + $0x158] sm:$0xff]
  %v430 = vld [vmem:[%s7 + $0x160] sm:$0xff]
  %v431 = vld [vmem:[%s7 + $0x168] sm:$0xf]
  %v432 = vld [vmem:[%s7 + $0x16c] sm:$0xff]
  %v433 = vld [vmem:[%s7 + $0x174] sm:$0xff]
  %v434 = vld [vmem:[%s7 + $0x17c] sm:$0xff]
  %v435 = vld [vmem:[%s7 + $0x184] sm:$0xf]
  %v436 = vld [vmem:[%s7 + $0x188] sm:$0xff]
  %v437 = vld [vmem:[%s7 + $0x190] sm:$0xff]
  %v438 = vld [vmem:[%s7 + $0x198] sm:$0xff]
  %v439 = vld [vmem:[%s7 + $0x1a0] sm:$0xf]
  %v440 = vld [vmem:[%s7 + $0x1a4] sm:$0xff]
  %v441 = vld [vmem:[%s7 + $0x1ac] sm:$0xff]
  %v442 = vld [vmem:[%s7 + $0x1b4] sm:$0xff]
  %v443 = vld [vmem:[%s7 + $0x1bc] sm:$0xf]
  %v444 = vld [vmem:[%s8] sm:$0xff]
  %v446 = vlaneseq
  %v447 = vshrl.u32 %v446, 7
  %v448 = vsub.s32 0, %v447
  %v449 = vrot.slane %v444, %v448
  %v450 = vlaneseq
  %v451 = vshrl.u32 %v450, 7
  %v452 = vsub.s32 1, %v451
  %v453 = vrot.slane %v444, %v452
  %v454 = vlaneseq
  %v455 = vshrl.u32 %v454, 7
  %v456 = vsub.s32 2, %v455
  %v457 = vrot.slane %v444, %v456
  %v458 = vlaneseq
  %v459 = vshrl.u32 %v458, 7
  %v460 = vsub.s32 3, %v459
  %v461 = vrot.slane %v444, %v460
  %v462 = vlaneseq
  %v463 = vshrl.u32 %v462, 7
  %v464 = vsub.s32 4, %v463
  %v465 = vrot.slane %v444, %v464
  %v466 = vlaneseq
  %v467 = vshrl.u32 %v466, 7
  %v468 = vsub.s32 5, %v467
  %v469 = vrot.slane %v444, %v468
  %v470 = vlaneseq
  %v471 = vshrl.u32 %v470, 7
  %v472 = vsub.s32 6, %v471
  %v473 = vrot.slane %v444, %v472
  %v545 = vunpack.c.l.b16 %v380
  %v546 = vunpack.c.h.b16 %v380
  %v547 = vunpack.c.l.b16 %v381
  %v548 = vunpack.c.h.b16 %v381
  %v549 = vunpack.c.l.b16 %v382
  %v550 = vunpack.c.h.b16 %v382
  %v551 = vunpack.c.l.b16 %v383
  %v552 = vunpack.c.l.b16 %v384
  %v553 = vunpack.c.h.b16 %v384
  %v554 = vunpack.c.l.b16 %v385
  %v555 = vunpack.c.h.b16 %v385
  %v556 = vunpack.c.l.b16 %v386
  %v557 = vunpack.c.h.b16 %v386
  %v558 = vunpack.c.l.b16 %v387
  %v559 = vunpack.c.l.b16 %v388
  %v560 = vunpack.c.h.b16 %v388
  %v561 = vunpack.c.l.b16 %v389
  %v562 = vunpack.c.h.b16 %v389
  %v563 = vunpack.c.l.b16 %v390
  %v564 = vunpack.c.h.b16 %v390
  %v565 = vunpack.c.l.b16 %v391
  %v566 = vunpack.c.l.b16 %v392
  %v567 = vunpack.c.h.b16 %v392
  %v568 = vunpack.c.l.b16 %v393
  %v569 = vunpack.c.h.b16 %v393
  %v570 = vunpack.c.l.b16 %v394
  %v571 = vunpack.c.h.b16 %v394
  %v572 = vunpack.c.l.b16 %v395
  %v573 = vunpack.c.l.b16 %v396
  %v574 = vunpack.c.h.b16 %v396
  %v575 = vunpack.c.l.b16 %v397
  %v576 = vunpack.c.h.b16 %v397
  %v577 = vunpack.c.l.b16 %v398
  %v578 = vunpack.c.h.b16 %v398
  %v579 = vunpack.c.l.b16 %v399
  %v580 = vunpack.c.l.b16 %v400
  %v581 = vunpack.c.h.b16 %v400
  %v582 = vunpack.c.l.b16 %v401
  %v583 = vunpack.c.h.b16 %v401
  %v584 = vunpack.c.l.b16 %v402
  %v585 = vunpack.c.h.b16 %v402
  %v586 = vunpack.c.l.b16 %v403
  %v587 = vunpack.c.l.b16 %v404
  %v588 = vunpack.c.h.b16 %v404
  %v589 = vunpack.c.l.b16 %v405
  %v590 = vunpack.c.h.b16 %v405
  %v591 = vunpack.c.l.b16 %v406
  %v592 = vunpack.c.h.b16 %v406
  %v593 = vunpack.c.l.b16 %v407
  %v594 = vunpack.c.l.b16 %v408
  %v595 = vunpack.c.h.b16 %v408
  %v596 = vunpack.c.l.b16 %v409
  %v597 = vunpack.c.h.b16 %v409
  %v598 = vunpack.c.l.b16 %v410
  %v599 = vunpack.c.h.b16 %v410
  %v600 = vunpack.c.l.b16 %v411
  %v601 = vunpack.c.l.b16 %v412
  %v602 = vunpack.c.h.b16 %v412
  %v603 = vunpack.c.l.b16 %v413
  %v604 = vunpack.c.h.b16 %v413
  %v605 = vunpack.c.l.b16 %v414
  %v606 = vunpack.c.h.b16 %v414
  %v607 = vunpack.c.l.b16 %v415
  %v608 = vunpack.c.l.b16 %v416
  %v609 = vunpack.c.h.b16 %v416
  %v610 = vunpack.c.l.b16 %v417
  %v611 = vunpack.c.h.b16 %v417
  %v612 = vunpack.c.l.b16 %v418
  %v613 = vunpack.c.h.b16 %v418
  %v614 = vunpack.c.l.b16 %v419
  %v615 = vunpack.c.l.b16 %v420
  %v616 = vunpack.c.h.b16 %v420
  %v617 = vunpack.c.l.b16 %v421
  %v618 = vunpack.c.h.b16 %v421
  %v619 = vunpack.c.l.b16 %v422
  %v620 = vunpack.c.h.b16 %v422
  %v621 = vunpack.c.l.b16 %v423
  %v622 = vunpack.c.l.b16 %v424
  %v623 = vunpack.c.h.b16 %v424
  %v624 = vunpack.c.l.b16 %v425
  %v625 = vunpack.c.h.b16 %v425
  %v626 = vunpack.c.l.b16 %v426
  %v627 = vunpack.c.h.b16 %v426
  %v628 = vunpack.c.l.b16 %v427
  %v629 = vunpack.c.l.b16 %v428
  %v630 = vunpack.c.h.b16 %v428
  %v631 = vunpack.c.l.b16 %v429
  %v632 = vunpack.c.h.b16 %v429
  %v633 = vunpack.c.l.b16 %v430
  %v634 = vunpack.c.h.b16 %v430
  %v635 = vunpack.c.l.b16 %v431
  %v636 = vunpack.c.l.b16 %v432
  %v637 = vunpack.c.h.b16 %v432
  %v638 = vunpack.c.l.b16 %v433
  %v639 = vunpack.c.h.b16 %v433
  %v640 = vunpack.c.l.b16 %v434
  %v641 = vunpack.c.h.b16 %v434
  %v642 = vunpack.c.l.b16 %v435
  %v643 = vunpack.c.l.b16 %v436
  %v644 = vunpack.c.h.b16 %v436
  %v645 = vunpack.c.l.b16 %v437
  %v646 = vunpack.c.h.b16 %v437
  %v647 = vunpack.c.l.b16 %v438
  %v648 = vunpack.c.h.b16 %v438
  %v649 = vunpack.c.l.b16 %v439
  %v650 = vunpack.c.l.b16 %v440
  %v651 = vunpack.c.h.b16 %v440
  %v652 = vunpack.c.l.b16 %v441
  %v653 = vunpack.c.h.b16 %v441
  %v654 = vunpack.c.l.b16 %v442
  %v655 = vunpack.c.h.b16 %v442
  %v656 = vunpack.c.l.b16 %v443
  %v657 = vpack.c.b16 %v552, %v545
  %v658 = vpack.c.b16 %v553, %v546
  %v659 = vpack.c.b16 %v554, %v547
  %v660 = vpack.c.b16 %v555, %v548
  %v661 = vpack.c.b16 %v556, %v549
  %v662 = vpack.c.b16 %v557, %v550
  %v663 = vpack.c.b16 %v558, %v551
  %v664 = vpack.c.b16 %v566, %v559
  %v665 = vpack.c.b16 %v567, %v560
  %v666 = vpack.c.b16 %v568, %v561
  %v667 = vpack.c.b16 %v569, %v562
  %v668 = vpack.c.b16 %v570, %v563
  %v669 = vpack.c.b16 %v571, %v564
  %v670 = vpack.c.b16 %v572, %v565
  %v671 = vpack.c.b16 %v580, %v573
  %v672 = vpack.c.b16 %v581, %v574
  %v673 = vpack.c.b16 %v582, %v575
  %v674 = vpack.c.b16 %v583, %v576
  %v675 = vpack.c.b16 %v584, %v577
  %v676 = vpack.c.b16 %v585, %v578
  %v677 = vpack.c.b16 %v586, %v579
  %v678 = vpack.c.b16 %v594, %v587
  %v679 = vpack.c.b16 %v595, %v588
  %v680 = vpack.c.b16 %v596, %v589
  %v681 = vpack.c.b16 %v597, %v590
  %v682 = vpack.c.b16 %v598, %v591
  %v683 = vpack.c.b16 %v599, %v592
  %v684 = vpack.c.b16 %v600, %v593
  %v685 = vpack.c.b16 %v608, %v601
  %v686 = vpack.c.b16 %v609, %v602
  %v687 = vpack.c.b16 %v610, %v603
  %v688 = vpack.c.b16 %v611, %v604
  %v689 = vpack.c.b16 %v612, %v605
  %v690 = vpack.c.b16 %v613, %v606
  %v691 = vpack.c.b16 %v614, %v607
  %v692 = vpack.c.b16 %v622, %v615
  %v693 = vpack.c.b16 %v623, %v616
  %v694 = vpack.c.b16 %v624, %v617
  %v695 = vpack.c.b16 %v625, %v618
  %v696 = vpack.c.b16 %v626, %v619
  %v697 = vpack.c.b16 %v627, %v620
  %v698 = vpack.c.b16 %v628, %v621
  %v699 = vpack.c.b16 %v636, %v629
  %v700 = vpack.c.b16 %v637, %v630
  %v701 = vpack.c.b16 %v638, %v631
  %v702 = vpack.c.b16 %v639, %v632
  %v703 = vpack.c.b16 %v640, %v633
  %v704 = vpack.c.b16 %v641, %v634
  %v705 = vpack.c.b16 %v642, %v635
  %v706 = vpack.c.b16 %v650, %v643
  %v707 = vpack.c.b16 %v651, %v644
  %v708 = vpack.c.b16 %v652, %v645
  %v709 = vpack.c.b16 %v653, %v646
  %v710 = vpack.c.b16 %v654, %v647
  %v711 = vpack.c.b16 %v655, %v648
  %v712 = vpack.c.b16 %v656, %v649
  %769 = vmatprep.subr.bf16.mxu0 %v658
  %770 = vmatpush1.bf16.msra.mxu0 %v657
  %771 = vmatprep.subr.bf16.mxu0 %v665
  %772 = vmatpush1.bf16.msra.mxu0 %v664
  %773 = vmatprep.subr.bf16.mxu0 %v672
  %774 = vmatpush1.bf16.msra.mxu0 %v671
  %775 = vmatprep.subr.bf16.mxu0 %v679
  %776 = vmatpush1.bf16.msra.mxu0 %v678
  %777 = vmatprep.subr.bf16.mxu0 %v686
  %778 = vmatpush1.bf16.msra.mxu0 %v685
  %779 = vmatprep.subr.bf16.mxu0 %v693
  %780 = vmatpush1.bf16.msra.mxu0 %v692
  %781 = vmatprep.subr.bf16.mxu0 %v700
  %782 = vmatpush1.bf16.msra.mxu0 %v699
  %783 = vmatprep.subr.bf16.mxu0 %v707
  %784 = vmatpush1.bf16.msra.mxu0 %v706
  %785 = vmatprep.subr.bf16.mxu0 0
  %786 = vmatpush1.bf16.msra.mxu0 0
  %787 = vmatprep.subr.bf16.mxu0 0
  %788 = vmatpush1.bf16.msra.mxu0 0
  %789 = vmatprep.subr.bf16.mxu0 0
  %790 = vmatpush1.bf16.msra.mxu0 0
  %791 = vmatprep.subr.bf16.mxu0 0
  %792 = vmatpush1.bf16.msra.mxu0 0
  %793 = vmatprep.subr.bf16.mxu0 0
  %794 = vmatpush1.bf16.msra.mxu0 0
  %795 = vmatprep.subr.bf16.mxu0 0
  %796 = vmatpush1.bf16.msra.mxu0 0
  %797 = vmatprep.subr.bf16.mxu0 0
  %798 = vmatpush1.bf16.msra.mxu0 0
  %799 = vmatprep.subr.bf16.mxu0 0
  %800 = vmatpush1.bf16.msra.mxu0 0
  %801 = vmatprep.mubr.bf16.mxu0 0
  %802 = vmatmul.mubr.bf16.gmra.mrb[0].mxu0 %v379
  %v803 = vpop.f32.mrb[0].mxu0
  %v804 = vadd.f32 %v449, %v803
  %v805 = vpop.f32.mrb[0].mxu0
  %v806 = vadd.f32 %v453, %v805
  %v807 = vpop.f32.mrb[0].mxu0
  %v808 = vpop.f32.mrb[0].mxu0
  %809 = vdwg.mxu0
  %810 = vmatprep.subr.bf16.mxu0 %v660
  %811 = vmatpush1.bf16.msra.mxu0 %v659
  %812 = vmatprep.subr.bf16.mxu0 %v667
  %813 = vmatpush1.bf16.msra.mxu0 %v666
  %814 = vmatprep.subr.bf16.mxu0 %v674
  %815 = vmatpush1.bf16.msra.mxu0 %v673
  %816 = vmatprep.subr.bf16.mxu0 %v681
  %817 = vmatpush1.bf16.msra.mxu0 %v680
  %818 = vmatprep.subr.bf16.mxu0 %v688
  %819 = vmatpush1.bf16.msra.mxu0 %v687
  %820 = vmatprep.subr.bf16.mxu0 %v695
  %821 = vmatpush1.bf16.msra.mxu0 %v694
  %822 = vmatprep.subr.bf16.mxu0 %v702
  %823 = vmatpush1.bf16.msra.mxu0 %v701
  %824 = vmatprep.subr.bf16.mxu0 %v709
  %825 = vmatpush1.bf16.msra.mxu0 %v708
  %826 = vmatprep.subr.bf16.mxu0 0
  %827 = vmatpush1.bf16.msra.mxu0 0
  %828 = vmatprep.subr.bf16.mxu0 0
  %829 = vmatpush1.bf16.msra.mxu0 0
  %830 = vmatprep.subr.bf16.mxu0 0
  %831 = vmatpush1.bf16.msra.mxu0 0
  %832 = vmatprep.subr.bf16.mxu0 0
  %833 = vmatpush1.bf16.msra.mxu0 0
  %834 = vmatprep.subr.bf16.mxu0 0
  %835 = vmatpush1.bf16.msra.mxu0 0
  %836 = vmatprep.subr.bf16.mxu0 0
  %837 = vmatpush1.bf16.msra.mxu0 0
  %838 = vmatprep.subr.bf16.mxu0 0
  %839 = vmatpush1.bf16.msra.mxu0 0
  %840 = vmatprep.subr.bf16.mxu0 0
  %841 = vmatpush1.bf16.msra.mxu0 0
  %842 = vmatprep.mubr.bf16.mxu0 0
  %843 = vmatmul.mubr.bf16.gmra.mrb[0].mxu0 %v379
  %v844 = vpop.f32.mrb[0].mxu0
  %v845 = vadd.f32 %v457, %v844
  %v846 = vpop.f32.mrb[0].mxu0
  %v847 = vadd.f32 %v461, %v846
  %v848 = vpop.f32.mrb[0].mxu0
  %v849 = vpop.f32.mrb[0].mxu0
  %850 = vdwg.mxu0
  %851 = vmatprep.subr.bf16.mxu0 %v662
  %852 = vmatpush1.bf16.msra.mxu0 %v661
  %853 = vmatprep.subr.bf16.mxu0 %v669
  %854 = vmatpush1.bf16.msra.mxu0 %v668
  %855 = vmatprep.subr.bf16.mxu0 %v676
  %856 = vmatpush1.bf16.msra.mxu0 %v675
  %857 = vmatprep.subr.bf16.mxu0 %v683
  %858 = vmatpush1.bf16.msra.mxu0 %v682
  %859 = vmatprep.subr.bf16.mxu0 %v690
  %860 = vmatpush1.bf16.msra.mxu0 %v689
  %861 = vmatprep.subr.bf16.mxu0 %v697
  %862 = vmatpush1.bf16.msra.mxu0 %v696
  %863 = vmatprep.subr.bf16.mxu0 %v704
  %864 = vmatpush1.bf16.msra.mxu0 %v703
  %865 = vmatprep.subr.bf16.mxu0 %v711
  %866 = vmatpush1.bf16.msra.mxu0 %v710
  %867 = vmatprep.subr.bf16.mxu0 0
  %868 = vmatpush1.bf16.msra.mxu0 0
  %869 = vmatprep.subr.bf16.mxu0 0
  %870 = vmatpush1.bf16.msra.mxu0 0
  %871 = vmatprep.subr.bf16.mxu0 0
  %872 = vmatpush1.bf16.msra.mxu0 0
  %873 = vmatprep.subr.bf16.mxu0 0
  %874 = vmatpush1.bf16.msra.mxu0 0
  %875 = vmatprep.subr.bf16.mxu0 0
  %876 = vmatpush1.bf16.msra.mxu0 0
  %877 = vmatprep.subr.bf16.mxu0 0
  %878 = vmatpush1.bf16.msra.mxu0 0
  %879 = vmatprep.subr.bf16.mxu0 0
  %880 = vmatpush1.bf16.msra.mxu0 0
  %881 = vmatprep.subr.bf16.mxu0 0
  %882 = vmatpush1.bf16.msra.mxu0 0
  %883 = vmatprep.mubr.bf16.mxu0 0
  %884 = vmatmul.mubr.bf16.gmra.mrb[0].mxu0 %v379
  %v885 = vpop.f32.mrb[0].mxu0
  %v886 = vadd.f32 %v465, %v885
  %v887 = vpop.f32.mrb[0].mxu0
  %v888 = vadd.f32 %v469, %v887
  %v889 = vpop.f32.mrb[0].mxu0
  %v890 = vpop.f32.mrb[0].mxu0
  %891 = vdwg.mxu0
  %892 = vmatprep.subr.bf16.mxu0 0
  %893 = vmatpush1.bf16.msra.mxu0 %v663
  %894 = vmatprep.subr.bf16.mxu0 0
  %895 = vmatpush1.bf16.msra.mxu0 %v670
  %896 = vmatprep.subr.bf16.mxu0 0
  %897 = vmatpush1.bf16.msra.mxu0 %v677
  %898 = vmatprep.subr.bf16.mxu0 0
  %899 = vmatpush1.bf16.msra.mxu0 %v684
  %900 = vmatprep.subr.bf16.mxu0 0
  %901 = vmatpush1.bf16.msra.mxu0 %v691
  %902 = vmatprep.subr.bf16.mxu0 0
  %903 = vmatpush1.bf16.msra.mxu0 %v698
  %904 = vmatprep.subr.bf16.mxu0 0
  %905 = vmatpush1.bf16.msra.mxu0 %v705
  %906 = vmatprep.subr.bf16.mxu0 0
  %907 = vmatpush1.bf16.msra.mxu0 %v712
  %908 = vmatprep.subr.bf16.mxu0 0
  %909 = vmatpush1.bf16.msra.mxu0 0
  %910 = vmatprep.subr.bf16.mxu0 0
  %911 = vmatpush1.bf16.msra.mxu0 0
  %912 = vmatprep.subr.bf16.mxu0 0
  %913 = vmatpush1.bf16.msra.mxu0 0
  %914 = vmatprep.subr.bf16.mxu0 0
  %915 = vmatpush1.bf16.msra.mxu0 0
  %916 = vmatprep.subr.bf16.mxu0 0
  %917 = vmatpush1.bf16.msra.mxu0 0
  %918 = vmatprep.subr.bf16.mxu0 0
  %919 = vmatpush1.bf16.msra.mxu0 0
  %920 = vmatprep.subr.bf16.mxu0 0
  %921 = vmatpush1.bf16.msra.mxu0 0
  %922 = vmatprep.subr.bf16.mxu0 0
  %923 = vmatpush1.bf16.msra.mxu0 0
  %924 = vmatprep.mubr.bf16.mxu0 0
  %925 = vmatmul.mubr.bf16.gmra.mrb[0].mxu0 %v379
  %v926 = vpop.f32.mrb[0].mxu0
  %v927 = vadd.f32 %v473, %v926
  %v928 = vpop.f32.mrb[0].mxu0
  %v929 = vpop.f32.mrb[0].mxu0
  %v930 = vpop.f32.mrb[0].mxu0
  %931 = vdwg.mxu0
  %v932 = vtanh.pop %v804
  %v933 = vtanh.pop %v806
  %v934 = vtanh.pop %v845
  %v935 = vtanh.pop %v847
  %v936 = vtanh.pop %v886
  %v937 = vtanh.pop %v888
  %v938 = vtanh.pop %v927
  %939 = vst [vmem:[%s9] sm:$0xff] %v932
  %940 = vst [vmem:[%s9 + $0x8] sm:$0xff] %v933
  %941 = vst [vmem:[%s9 + $0x10] sm:$0xff] %v934
  %942 = vst [vmem:[%s9 + $0x18] sm:$0xff] %v935
  %943 = vst [vmem:[%s9 + $0x20] sm:$0xff] %v936
  %944 = vst [vmem:[%s9 + $0x28] sm:$0xff] %v937
  %945 = vst [vmem:[%s9 + $0x30] sm:$0xff] %v938
  // Predicated region
  $region38: #{generator_forward.1} parent=0 // pred_check
    _
  $region39: #{generator_forward.1} parent=0 // pred_check_branch
    %947 = sbr.rel (0) target = $region41
  $region40: #{generator_forward.1} parent=0 // pred_region
    _
  $region41: #{generator_forward.1} parent=0 // pred_fallthru
    _
  // Predicated region
  $region42: #{generator_forward.1} parent=0 // pred_check
    _
  $region43: #{generator_forward.1} parent=0 // pred_check_branch
    %949 = sbr.rel (0) target = $region45
  $region44: #{generator_forward.1} parent=0 // pred_region
    _
  $region45: #{generator_forward.1} parent=0 // pred_fallthru
    _

</llo_original>
